<compile_context>
chip_gen: v7x
topology: tpu7x:2x2x1
jax: 0.10.0
libtpu: 0.0.40
codegen_flags: <defaults>
</compile_context>

<pallas_src>
import functools

import jax
import jax.numpy as jnp
from jax import lax
from jax.experimental import pallas as pl
from jax.experimental.pallas import tpu as pltpu

_LANE = 128
_SUBLANE = 8


def _round_up(a, b):
    return (a + b - 1) // b * b


def _cdiv(a, b):
    return -(-a // b)


def _vmem_budgets():
    """(input-stream budget, scoped vmem limit) chosen per TPU generation."""
    vmem = None
    try:
        info = pltpu.get_tpu_info()
        vmem = getattr(info, "vmem_capacity_bytes", None)
    except Exception:      # pragma: no cover - fall back to conservative caps
        vmem = None
    if vmem is not None and vmem >= (128 << 20):   # v5e / v6e: 128 MiB physical
        return 48 << 20, 96 << 20
    return 16 << 20, 32 << 20                      # v7x-safe (64 MiB physical)


# ----------------------------- pointwise kernel ------------------------------

def _normalize_rows(x):
    # torch: x / (x.norm(p=2, dim=1, keepdim=True) + 1e-10)
    # One (exact) reciprocal per row + d multiplies instead of d divides.
    nrm = jnp.sqrt(jnp.sum(x * x, axis=1, keepdims=True))
    inv = pl.reciprocal(nrm + 1e-10, approx=False)
    return x * inv


def _pointwise_body(x_ref, y_ref, w_ref, out_ref, *, reg_norm, reg_type,
                    elementwise, ragged, n_rows, tile):
    x = x_ref[...].astype(jnp.float32)
    y = y_ref[...].astype(jnp.float32)
    if reg_norm:
        x = _normalize_rows(x)
        y = _normalize_rows(y)
    diff = x - y
    if reg_type == 'MSE':
        off = diff * diff
    elif reg_type == 'RMSE':
        off = jnp.sqrt(diff * diff + 1e-10)
    elif reg_type == 'MAE':
        off = jnp.abs(diff)
    else:
        raise TypeError(reg_type + ' is not implemented')
    if w_ref is not None:
        off = off * w_ref[...].astype(jnp.float32)

    if elementwise:
        # Out-of-bounds rows of a ragged last tile are dropped on write.
        out_ref[...] = off.astype(out_ref.dtype)
        return

    if ragged:
        # Mask garbage rows of the ragged last tile (select is NaN-safe).
        rows = pl.program_id(0) * tile + lax.broadcasted_iota(
            jnp.int32, (tile, 1), 0)
        off = jnp.where(rows < n_rows, off, 0.0)
    s = jnp.sum(off)
    sub = lax.broadcasted_iota(jnp.int32, (_SUBLANE, _LANE), 0)
    lane = lax.broadcasted_iota(jnp.int32, (_SUBLANE, _LANE), 1)
    # Partial sum in element [0, 0]; wrapper does a contiguous jnp.sum.
    out_ref[...] = jnp.where((sub == 0) & (lane == 0), s, 0.0)


def _pointwise_kernel_w(x_ref, y_ref, w_ref, out_ref, **kw):
    _pointwise_body(x_ref, y_ref, w_ref, out_ref, **kw)


def _pointwise_kernel_nw(x_ref, y_ref, out_ref, **kw):
    _pointwise_body(x_ref, y_ref, None, out_ref, **kw)


def _pointwise_call(x, y, w, reg_norm, reg_type, reduction):
    n, d = x.shape
    # torch's _get_: anything other than 'mean'/'sum' returns the tensor.
    elementwise = reduction not in ('mean', 'sum')
    has_weights = w is not None

    in_budget, vmem_limit = _vmem_budgets()

    # Row-tile: largest multiple of 8 whose double-buffered streams fit the
    # per-generation VMEM budget.
    n_streams = (3 if has_weights else 2) + (1 if elementwise else 0)
    per_row_bytes = d * 4 * n_streams * 2           # x2: double buffering
    cap = 2048 if in_budget > (16 << 20) else 512
    tile = min(cap, _round_up(n, _SUBLANE))
    while tile > _SUBLANE and tile * per_row_bytes > in_budget:
        tile = max(_SUBLANE, _round_up(tile // 2, _SUBLANE))
    num_tiles = _cdiv(n, tile)
    if num_tiles == 1:
        tile = n                                     # exact fit, never ragged
    elif num_tiles % 2:                              # balance v7x's two cores
        num_tiles += 1
        tile = max(_SUBLANE, _round_up(_cdiv(n, num_tiles), _SUBLANE))
        num_tiles = _cdiv(n, tile)
    ragged = (n % tile) != 0

    kernel = functools.partial(
        _pointwise_kernel_w if has_weights else _pointwise_kernel_nw,
        reg_norm=reg_norm, reg_type=reg_type, elementwise=elementwise,
        ragged=ragged, n_rows=n, tile=tile)

    row_spec = pl.BlockSpec((tile, d), lambda i: (i, 0))
    in_specs = [row_spec, row_spec] + ([row_spec] if has_weights else [])
    if elementwise:
        out_shape = jax.ShapeDtypeStruct((n, d), jnp.float32)
        out_spec = pl.BlockSpec((tile, d), lambda i: (i, 0))
        out_bytes = n * d * 4
    else:
        out_shape = jax.ShapeDtypeStruct((num_tiles * _SUBLANE, _LANE),
                                         jnp.float32)
        out_spec = pl.BlockSpec((_SUBLANE, _LANE), lambda i: (i, 0))
        out_bytes = num_tiles * _SUBLANE * _LANE * 4

    args = (x, y, w) if has_weights else (x, y)
    in_bytes = sum(int(a.size) * a.dtype.itemsize for a in args)
    cost = pl.CostEstimate(
        flops=int((8 if reg_norm else 3) * n * d),
        transcendentals=int(n * d if reg_type == 'RMSE' else 0)
        + int(2 * n if reg_norm else 0),
        bytes_accessed=int(in_bytes + out_bytes))

    out = pl.pallas_call(
        kernel,
        out_shape=out_shape,
        grid=(num_tiles,),
        in_specs=in_specs,
        out_specs=out_spec,
        compiler_params=pltpu.CompilerParams(
            dimension_semantics=("parallel",),
            vmem_limit_bytes=vmem_limit),
        cost_estimate=cost,
    )(*args)

    if elementwise:
        return out
    total = jnp.sum(out)                             # contiguous tiny reduce
    if reduction == 'mean':
        total = total / jnp.float32(n * d)
    return total


# ----------------------------- BMC kernel ------------------------------------

def _bmc_kernel(scale_ref, x_ref, y_ref, yy_ref, out_ref, m_sc, l_sc, diag_sc,
                *, n_valid, tile, ragged):
    i = pl.program_id(0)
    j = pl.program_id(1)
    nj = pl.num_programs(1)

    @pl.when(j == 0)
    def _():
        m_sc[...] = jnp.full_like(m_sc, -1e30)
        l_sc[...] = jnp.zeros_like(l_sc)
        diag_sc[...] = jnp.zeros_like(diag_sc)

    x = x_ref[...].astype(jnp.float32)
    y = y_ref[...].astype(jnp.float32)
    scale = scale_ref[0, 0]                          # -0.5 / noise_var
    yy_row = yy_ref[0:1, :]                          # [1, tile] ||y_j||^2

    # MVN log-prob logits up to per-row constants (per-row constants cancel in
    # the cross-entropy): logits'_ij = scale * (||y_j||^2 - 2 <x_i, y_j>).
    xy = lax.dot_general(x, y, (((1,), (1,)), ((), ())),
                         preferred_element_type=jnp.float32)   # [tile, tile]
    logits = (yy_row - 2.0 * xy) * scale

    if ragged:
        cols = j * tile + lax.broadcasted_iota(jnp.int32, (1, tile), 1)
        logits = jnp.where(cols < n_valid, logits, -1e30)      # mask pad cols

    # Cross-entropy numerator: diagonal logit, only on diagonal tile pairs.
    @pl.when(i == j)
    def _():
        r = lax.broadcasted_iota(jnp.int32, (tile, 1), 0)
        c = lax.broadcasted_iota(jnp.int32, (1, tile), 1)
        diag_sc[...] = jnp.sum(jnp.where(r == c, logits, 0.0), axis=1,
                               keepdims=True)

    # Online logsumexp across column tiles.
    m_prev = m_sc[...]
    m_new = jnp.maximum(m_prev, jnp.max(logits, axis=1, keepdims=True))
    l_sc[...] = jnp.exp(m_prev - m_new) * l_sc[...] + jnp.sum(
        jnp.exp(logits - m_new), axis=1, keepdims=True)
    m_sc[...] = m_new

    @pl.when(j == nj - 1)
    def _():
        per_row = m_sc[...] + jnp.log(l_sc[...]) - diag_sc[...]   # [tile, 1]
        lane = lax.broadcasted_iota(jnp.int32, (tile, _LANE), 1)
        out_ref[...] = jnp.where(lane == 0, per_row, 0.0)


def _bmc_call(inputs, targets, noise_sigma, reg_norm):
    x = jnp.asarray(inputs, jnp.float32)
    y = jnp.asarray(targets, jnp.float32)
    if reg_norm:
        # Hoisted out of the O(n^2) kernel loop: O(n*d) wrapper work.
        x = x / (jnp.linalg.norm(x, axis=1, keepdims=True) + 1e-10)
        y = y / (jnp.linalg.norm(y, axis=1, keepdims=True) + 1e-10)
    n, d = x.shape

    in_budget, vmem_limit = _vmem_budgets()

    # Tile fitted to n (no padding up to 256 multiples).
    num_tiles = max(1, _cdiv(n, 256))
    if num_tiles > 1 and num_tiles % 2:
        num_tiles += 1                               # balance v7x's two cores
    tile = _round_up(_cdiv(n, num_tiles), _SUBLANE)

    def vmem_est(t):
        return 4 * (4 * t * d + 6 * t * t + 2 * t * _LANE
                    + 2 * _SUBLANE * t + 3 * t)

    while tile > _SUBLANE and vmem_est(tile) > in_budget:
        num_tiles *= 2
        tile = _round_up(_cdiv(n, num_tiles), _SUBLANE)
    num_tiles = _cdiv(n, tile)
    if num_tiles == 1:
        tile = n                                     # exact fit, never ragged
    ragged = (n % tile) != 0

    # TODO(synk): noise_sigma is a trainable nn.Parameter in torch; here it is
    # a plain scalar passed through SMEM (forward only, no autograd on it).
    noise_var = jnp.float32(noise_sigma) ** 2
    scale = (-0.5 / noise_var).reshape(1, 1).astype(jnp.float32)

    # Column squared norms, computed once (O(n*d)) and streamed as tiny
    # (8, tile) blocks so the kernel never re-reduces y inside the n^2 loop.
    yy = jnp.sum(y * y, axis=1)
    yy = jnp.pad(yy, ((0, num_tiles * tile - n),))
    yy_arr = jnp.pad(yy.reshape(num_tiles, 1, tile),
                     ((0, 0), (0, _SUBLANE - 1), (0, 0))
                     ).reshape(num_tiles * _SUBLANE, tile)

    kernel = functools.partial(_bmc_kernel, n_valid=n, tile=tile, ragged=ragged)

    cost = pl.CostEstimate(
        flops=int(2 * n * n * d + 8 * n * n),
        transcendentals=int(n * n + 2 * n),
        bytes_accessed=int(4 * (n * d * (num_tiles + 1) + n * _LANE)))

    out = pl.pallas_call(
        kernel,
        out_shape=jax.ShapeDtypeStruct((n, _LANE), jnp.float32),
        grid=(num_tiles, num_tiles),                 # rows parallel, cols reduce
        in_specs=[
            pl.BlockSpec((1, 1), lambda i, j: (0, 0),
                         memory_space=pltpu.MemorySpace.SMEM),       # scale
            pl.BlockSpec((tile, d), lambda i, j: (i, 0)),            # x rows
            pl.BlockSpec((tile, d), lambda i, j: (j, 0)),            # y cols
            pl.BlockSpec((_SUBLANE, tile), lambda i, j: (j, 0)),     # ||y||^2
        ],
        out_specs=pl.BlockSpec((tile, _LANE), lambda i, j: (i, 0)),
        scratch_shapes=[
            pltpu.VMEM((tile, 1), jnp.float32),      # running max
            pltpu.VMEM((tile, 1), jnp.float32),      # running sum-exp
            pltpu.VMEM((tile, 1), jnp.float32),      # diagonal logit
        ],
        compiler_params=pltpu.CompilerParams(
            dimension_semantics=("parallel", "arbitrary"),
            vmem_limit_bytes=vmem_limit),
        cost_estimate=cost,
    )(scale, x, y, yy_arr)

    ce = jnp.sum(out) / jnp.float32(n)               # mean_i [lse_i - logit_ii]
    return ce * 2.0 * noise_var


# ----------------------------- module wrapper ---------------------------------

class WeightedRegressLoss:
    """JAX/Pallas port of REZSL weighted_RegressLoss (forward only)."""

    def __init__(self, RegNorm, RegType):
        self.RegNorm = RegNorm
        self.RegType = RegType
        if RegType == 'BMC':
            self.noise_sigma = jnp.float32(0.1)      # init_noise_sigma = 0.1

    def __call__(self, inputs, targets, weights=None, reduction='mean'):
        inputs = jnp.asarray(inputs)                 # keep caller dtype (bf16 ok)
        targets = jnp.asarray(targets)
        if self.RegType == 'BMC':
            # weights / reduction unused in the torch BMC branch as well.
            return _bmc_call(inputs, targets, self.noise_sigma, self.RegNorm)
        elif self.RegType in ('MSE', 'RMSE', 'MAE'):
            w = None if weights is None else jnp.asarray(weights)
            return _pointwise_call(inputs, targets, w, self.RegNorm,
                                   self.RegType, reduction)
        else:
            raise TypeError(self.RegType + 'is not implemented')


# ----------------------------- pure-JAX reference ------------------------------

def _ref_normalize(x):
    nrm = jnp.linalg.norm(x, axis=1, keepdims=True)
    return x / (nrm + 1e-10)


def _ref_pointwise(x, y, w, reg_norm, reg_type, reduction):
    x = jnp.asarray(x, jnp.float32)
    y = jnp.asarray(y, jnp.float32)
    if reg_norm:
        x, y = _ref_normalize(x), _ref_normalize(y)
    if reg_type == 'MSE':
        off = (x - y) ** 2
    elif reg_type == 'RMSE':
        off = jnp.sqrt((x - y) ** 2 + 1e-10)
    else:
        off = jnp.abs(x - y)
    if w is not None:
        off = off * jnp.asarray(w, jnp.float32)
    if reduction == 'mean':
        return jnp.mean(off)
    if reduction == 'sum':
        return jnp.sum(off)
    return off


def _ref_bmc(x, y, sigma, reg_norm):
    x = jnp.asarray(x, jnp.float32)
    y = jnp.asarray(y, jnp.float32)
    if reg_norm:
        x, y = _ref_normalize(x), _ref_normalize(y)
    n, d = x.shape
    nv = jnp.float32(sigma) ** 2
    sq = jnp.sum((x[:, None, :] - y[None, :, :]) ** 2, axis=-1)
    logits = -0.5 * sq / nv - 0.5 * d * jnp.log(2.0 * jnp.pi * nv)
    logp = jax.nn.log_softmax(logits, axis=1)
    ce = -jnp.mean(logp[jnp.arange(n), jnp.arange(n)])
    return ce * 2.0 * nv


# ----------------------------- demo / checks -----------------------------------

if __name__ == "__main__":
    key = jax.random.PRNGKey(0)
    ok = True

    # --- small, (8,128)-unaligned feature dim ---
    k1, k2, k3 = jax.random.split(key, 3)
    n, d = 8, 32
    inputs = jax.random.normal(k1, (n, d), dtype=jnp.float32)
    targets = jax.random.normal(k2, (n, d), dtype=jnp.float32)
    weights = jax.random.uniform(k3, (n, d), dtype=jnp.float32)

    for reg_type in ('MSE', 'RMSE', 'MAE'):
        mod = WeightedRegressLoss(RegNorm=True, RegType=reg_type)
        out = mod(inputs, targets, weights, reduction='mean')
        jax.block_until_ready(out)
        ref = _ref_pointwise(inputs, targets, weights, True, reg_type, 'mean')
        ok &= bool(jnp.allclose(out, ref, rtol=1e-5, atol=1e-6))

    mod = WeightedRegressLoss(RegNorm=False, RegType='MSE')
    out = mod(inputs, targets, None, reduction='sum')
    jax.block_until_ready(out)
    ref = _ref_pointwise(inputs, targets, None, False, 'MSE', 'sum')
    ok &= bool(jnp.allclose(out, ref, rtol=1e-5, atol=1e-5))

    mod = WeightedRegressLoss(RegNorm=True, RegType='MAE')
    out = mod(inputs, targets, weights, reduction='none')
    jax.block_until_ready(out)
    ref = _ref_pointwise(inputs, targets, weights, True, 'MAE', 'none')
    ok &= bool(jnp.allclose(out, ref, rtol=1e-5, atol=1e-6))

    mod = WeightedRegressLoss(RegNorm=True, RegType='BMC')
    out = mod(inputs, targets)
    jax.block_until_ready(out)
    ref = _ref_bmc(inputs, targets, 0.1, True)
    ok &= bool(jnp.allclose(out, ref, rtol=1e-4, atol=1e-5))

    # --- larger, unaligned shapes: exercises BMC tiling + ragged column tiles ---
    k4, k5, k6 = jax.random.split(jax.random.PRNGKey(1), 3)
    n2, d2 = 300, 200
    x2 = jax.random.normal(k4, (n2, d2), dtype=jnp.float32)
    y2 = jax.random.normal(k5, (n2, d2), dtype=jnp.float32)
    w2 = jax.random.uniform(k6, (n2, d2), dtype=jnp.float32)

    mod = WeightedRegressLoss(RegNorm=True, RegType='MSE')
    out = mod(x2, y2, w2, reduction='mean')
    jax.block_until_ready(out)
    ref = _ref_pointwise(x2, y2, w2, True, 'MSE', 'mean')
    ok &= bool(jnp.allclose(out, ref, rtol=1e-4, atol=1e-6))

    mod = WeightedRegressLoss(RegNorm=True, RegType='BMC')
    out = mod(x2, y2)
    jax.block_until_ready(out)
    ref = _ref_bmc(x2, y2, 0.1, True)
    ok &= bool(jnp.allclose(out, ref, rtol=1e-4, atol=1e-5))

    # --- tall, unaligned case: exercises the multi-tile / ragged pointwise path ---
    k7, k8, k9 = jax.random.split(jax.random.PRNGKey(2), 3)
    n3, d3 = 2405, 256
    x3 = jax.random.normal(k7, (n3, d3), dtype=jnp.float32)
    y3 = jax.random.normal(k8, (n3, d3), dtype=jnp.float32)
    w3 = jax.random.uniform(k9, (n3, d3), dtype=jnp.float32)
    mod = WeightedRegressLoss(RegNorm=False, RegType='MAE')
    out = mod(x3, y3, w3, reduction='mean')
    jax.block_until_ready(out)
    ref = _ref_pointwise(x3, y3, w3, False, 'MAE', 'mean')
    ok &= bool(jnp.allclose(out, ref, rtol=2e-4, atol=1e-6))

    if ok:
        print("KERNEL_OK")
    else:
        print("MISMATCH")
</pallas_src>

<mosaic_0001>
module attributes {stable_mosaic.version = 11 : i64} {
  func.func @_pointwise_kernel_w(%arg0: i32, %arg1: memref<8x32xf32, #tpu.memory_space<vmem>>, %arg2: memref<8x32xf32, #tpu.memory_space<vmem>>, %arg3: memref<8x32xf32, #tpu.memory_space<vmem>>, %arg4: memref<8x128xf32, #tpu.memory_space<vmem>>) attributes {dimension_semantics = [#tpu.dimension_semantics<parallel>], iteration_bounds = array<i64: 1>, scalar_prefetch = 0 : i64, scratch_operands = 0 : i64, tpu.core_type = #tpu.core_type<tc>, window_params = [{transform_indices = @transform_0, window_bounds = array<i64: 8, 32>}, {transform_indices = @transform_1, window_bounds = array<i64: 8, 32>}, {transform_indices = @transform_2, window_bounds = array<i64: 8, 32>}, {transform_indices = @transform_3, window_bounds = array<i64: 8, 128>}]} {
    %c0 = arith.constant 0 : index
    %c0_0 = arith.constant 0 : index
    %0 = vector.load %arg1[%c0, %c0_0] : memref<8x32xf32, #tpu.memory_space<vmem>>, vector<8x32xf32>
    %c0_1 = arith.constant 0 : index
    %c0_2 = arith.constant 0 : index
    %1 = vector.load %arg2[%c0_1, %c0_2] : memref<8x32xf32, #tpu.memory_space<vmem>>, vector<8x32xf32>
    %2 = arith.mulf %0, %0 : vector<8x32xf32>
    %cst = arith.constant dense<0.000000e+00> : vector<8xf32>
    %3 = vector.multi_reduction <add>, %2, %cst [1] : vector<8x32xf32> to vector<8xf32>
    %4 = vector.shape_cast %3 : vector<8xf32> to vector<8x1xf32>
    %5 = math.sqrt %4 : vector<8x1xf32>
    %cst_3 = arith.constant 1.000000e-10 : f32
    %6 = vector.broadcast %cst_3 : f32 to vector<8x1xf32>
    %7 = arith.addf %5, %6 : vector<8x1xf32>
    %8 = tpu.reciprocal %7 : vector<8x1xf32> -> vector<8x1xf32>
    %9 = vector.broadcast %8 : vector<8x1xf32> to vector<8x32xf32>
    %10 = arith.mulf %0, %9 : vector<8x32xf32>
    %11 = arith.mulf %1, %1 : vector<8x32xf32>
    %cst_4 = arith.constant dense<0.000000e+00> : vector<8xf32>
    %12 = vector.multi_reduction <add>, %11, %cst_4 [1] : vector<8x32xf32> to vector<8xf32>
    %13 = vector.shape_cast %12 : vector<8xf32> to vector<8x1xf32>
    %14 = math.sqrt %13 : vector<8x1xf32>
    %cst_5 = arith.constant 1.000000e-10 : f32
    %15 = vector.broadcast %cst_5 : f32 to vector<8x1xf32>
    %16 = arith.addf %14, %15 : vector<8x1xf32>
    %17 = tpu.reciprocal %16 : vector<8x1xf32> -> vector<8x1xf32>
    %18 = vector.broadcast %17 : vector<8x1xf32> to vector<8x32xf32>
    %19 = arith.mulf %1, %18 : vector<8x32xf32>
    %20 = arith.subf %10, %19 : vector<8x32xf32>
    %21 = arith.mulf %20, %20 : vector<8x32xf32>
    %c0_6 = arith.constant 0 : index
    %c0_7 = arith.constant 0 : index
    %22 = vector.load %arg3[%c0_6, %c0_7] : memref<8x32xf32, #tpu.memory_space<vmem>>, vector<8x32xf32>
    %23 = arith.mulf %21, %22 : vector<8x32xf32>
    %24 = vector.shape_cast %23 : vector<8x32xf32> to vector<1x8x32xf32>
    %cst_8 = arith.constant dense<0.000000e+00> : vector<1xf32>
    %25 = vector.multi_reduction <add>, %24, %cst_8 [1, 2] : vector<1x8x32xf32> to vector<1xf32>
    %26 = vector.shape_cast %25 : vector<1xf32> to vector<1x1x1xf32>
    %27 = vector.extract %26[0, 0, 0] : f32 from vector<1x1x1xf32>
    %28 = tpu.iota {dimensions = array<i32: 0>} : vector<8x128xi32>
    %29 = tpu.iota {dimensions = array<i32: 1>} : vector<8x128xi32>
    %c0_i32 = arith.constant 0 : i32
    %30 = vector.broadcast %c0_i32 : i32 to vector<8x128xi32>
    %31 = arith.cmpi eq, %28, %30 : vector<8x128xi32>
    %c0_i32_9 = arith.constant 0 : i32
    %32 = vector.broadcast %c0_i32_9 : i32 to vector<8x128xi32>
    %33 = arith.cmpi eq, %29, %32 : vector<8x128xi32>
    %34 = arith.andi %31, %33 : vector<8x128xi1>
    %cst_10 = arith.constant 0.000000e+00 : f32
    %35 = vector.broadcast %27 : f32 to vector<8x128xf32>
    %36 = vector.broadcast %cst_10 : f32 to vector<8x128xf32>
    %37 = arith.select %34, %35, %36 : vector<8x128xi1>, vector<8x128xf32>
    %c0_11 = arith.constant 0 : index
    %c0_12 = arith.constant 0 : index
    %38 = vector.load %arg4[%c0_11, %c0_12] : memref<8x128xf32, #tpu.memory_space<vmem>>, vector<8x128xf32>
    tpu.vector_store %arg4[%c0_11, %c0_12], %37 {strides = array<i32>} : memref<8x128xf32, #tpu.memory_space<vmem>>, vector<8x128xf32>,
    return
  }
  func.func @transform_0(%arg0: i32) -> (i32, i32) {
    %c0_i32 = arith.constant 0 : i32
    %c0_i32_0 = arith.constant 0 : i32
    return %arg0, %c0_i32 : i32, i32
  }
  func.func @transform_1(%arg0: i32) -> (i32, i32) {
    %c0_i32 = arith.constant 0 : i32
    %c0_i32_0 = arith.constant 0 : i32
    return %arg0, %c0_i32 : i32, i32
  }
  func.func @transform_2(%arg0: i32) -> (i32, i32) {
    %c0_i32 = arith.constant 0 : i32
    %c0_i32_0 = arith.constant 0 : i32
    return %arg0, %c0_i32 : i32, i32
  }
  func.func @transform_3(%arg0: i32) -> (i32, i32) {
    %c0_i32 = arith.constant 0 : i32
    %c0_i32_0 = arith.constant 0 : i32
    return %arg0, %c0_i32 : i32, i32
  }
}

</mosaic_0001>

<llo_original>
// kernel: tpu_custom_call.1
$region0: #{tpu_custom_call.1}
  #allocation0 [shape = 'u32[]', space=smem, size = 0x4, offset = 0x4, fixed_abs, tag = 'smem constant byte address 0x4 - core index']
  #allocation1 [shape = 'u32[144,128]{1,0:T(1,128)}', space=vmem, size = 0x12000, scoped, tag = 'internal scratch']
  %s0 = inlined_call_operand.hbm [shape: f32[8,32], index: 0, kind: input, shape index: {}]
  %s1 = inlined_call_operand.hbm [shape: f32[8,32], index: 1, kind: input, shape index: {}]
  %s2 = inlined_call_operand.hbm [shape: f32[8,32], index: 2, kind: input, shape index: {}]
  %s3 = inlined_call_operand.hbm [shape: f32[8,128], index: 3, kind: output, shape index: {}]
  %s4 = sld [smem:[#allocation0]]
  $region34: #{tpu_custom_call.1} parent=0
    _
  %s6 = ssub.s32 1, %s4
  %s7 = scalar_select 0, %s6, %s4
  $region1: #{tpu_custom_call.1} parent=0
    #allocation2 [shape = 'u8[4096]{0}', space=vmem, size = 0x1000, scoped, tag = 'input window, operand 0, single buffered']
    #allocation3 [shape = 's32[1]{0}', space=sflag, size = 0x4, scoped, tag = 'scoped memory for tpu_custom_call.1']
    #allocation4 [shape = 's32[1]{0}', space=sflag, size = 0x4, scoped, tag = 'scoped memory for tpu_custom_call.1']
    #allocation5 [shape = 'u8[4096]{0}', space=vmem, size = 0x1000, scoped, tag = 'input window, operand 1, single buffered']
    #allocation6 [shape = 's32[1]{0}', space=sflag, size = 0x4, scoped, tag = 'scoped memory for tpu_custom_call.1']
    #allocation7 [shape = 'u8[4096]{0}', space=vmem, size = 0x1000, scoped, tag = 'input window, operand 2, single buffered']
    #allocation8 [shape = 'u8[4096]{0}', space=vmem, size = 0x1000, scoped, tag = 'output window, operand 0, single buffered']
    %8 = vsyncpa [#allocation3], 0
    %9 = vsyncpa [#allocation6], 0
    %10 = vsyncpa [#allocation4], 0
    // Predicated region
    $region2: #{tpu_custom_call.1} parent=1 // pred_check
      _
    $region3: #{tpu_custom_call.1} parent=1 // pred_check_branch
      %12 = sbr.rel (0) target = $region5
    $region4: #{tpu_custom_call.1} parent=1 // pred_region
      %s14 = ssub.s32 128, 128
      %15 = vsyncadd [#allocation3], %s14
      %s17 = sshll.u32 [#allocation2], 4
      %s18 = int_to_ptr.vmem [resolvable:$true] %s17
      %20 = dma.hbm_to_vmem [thread:$0]  %s0, 128, %s18, [#allocation3]
    $region5: #{tpu_custom_call.1} parent=1 // pred_fallthru
      _
    // Predicated region
    $region6: #{tpu_custom_call.1} parent=1 // pred_check
      _
    $region7: #{tpu_custom_call.1} parent=1 // pred_check_branch
      %22 = sbr.rel (0) target = $region9
    $region8: #{tpu_custom_call.1} parent=1 // pred_region
      %s24 = ssub.s32 128, 128
      %25 = vsyncadd [#allocation6], %s24
      %s27 = sshll.u32 [#allocation5], 4
      %s28 = int_to_ptr.vmem [resolvable:$true] %s27
      %30 = dma.hbm_to_vmem [thread:$0]  %s1, 128, %s28, [#allocation6]
    $region9: #{tpu_custom_call.1} parent=1 // pred_fallthru
      _
    // Predicated region
    $region10: #{tpu_custom_call.1} parent=1 // pred_check
      _
    $region11: #{tpu_custom_call.1} parent=1 // pred_check_branch
      %32 = sbr.rel (0) target = $region13
    $region12: #{tpu_custom_call.1} parent=1 // pred_region
      %s34 = ssub.s32 128, 128
      %35 = vsyncadd [#allocation6], %s34
      %s37 = sshll.u32 [#allocation7], 4
      %s38 = int_to_ptr.vmem [resolvable:$true] %s37
      %40 = dma.hbm_to_vmem [thread:$0]  %s2, 128, %s38, [#allocation6]
    $region13: #{tpu_custom_call.1} parent=1 // pred_fallthru
      _
    // Predicated region
    $region14: #{tpu_custom_call.1} parent=1 // pred_check
      _
    $region15: #{tpu_custom_call.1} parent=1 // pred_check_branch
      %42 = sbr.rel (0) target = $region17
    $region16: #{tpu_custom_call.1} parent=1 // pred_region
      %43 = dma.done [#allocation3], 128
    $region17: #{tpu_custom_call.1} parent=1 // pred_fallthru
      _
    // Predicated region
    $region18: #{tpu_custom_call.1} parent=1 // pred_check
      _
    $region19: #{tpu_custom_call.1} parent=1 // pred_check_branch
      %45 = sbr.rel (0) target = $region21
    $region20: #{tpu_custom_call.1} parent=1 // pred_region
      %46 = dma.done [#allocation6], 128
    $region21: #{tpu_custom_call.1} parent=1 // pred_fallthru
      _
    // Predicated region
    $region22: #{tpu_custom_call.1} parent=1 // pred_check
      _
    $region23: #{tpu_custom_call.1} parent=1 // pred_check_branch
      %48 = sbr.rel (0) target = $region25
    $region24: #{tpu_custom_call.1} parent=1 // pred_region
      %49 = dma.done [#allocation6], 128
    $region25: #{tpu_custom_call.1} parent=1 // pred_fallthru
      _
    %v50 = vld [vmem:[#allocation2] sm:$0xff]
    %v51 = vld [vmem:[#allocation5] sm:$0xff]
    %v52 = vmul.f32 %v50, %v50
    %vm53 = vcmask 261120
    %v54 = vsel %vm53, %v52, 0.0
    %55 = vadd.xlane.f32.xlu0 %v54
    %v56 = vpop.xlane.xlu0 %55
    %v57 = vrsqrt.pop %v56
    %v58 = vmul.f32 %v56, %v57
    %vm59 = vcmp.eq.f32.partialorder %v56, inf
    %v60 = vsel %vm59, %v56, %v58
    %vm61 = vcmp.eq.f32.partialorder %v56, 0.0
    %v62 = vand.u32 %v56, 2147483648
    %v63 = vsel %vm61, %v62, %v60
    %v64 = vadd.f32 %v63, 1e-10
    %v65 = vrcp.pop %v64
    %v66 = vmul.f32 %v50, %v65
    %v67 = vmul.f32 %v51, %v51
    %v68 = vsel %vm53, %v67, 0.0
    %69 = vadd.xlane.f32.xlu0 %v68
    %v70 = vpop.xlane.xlu0 %69
    %v71 = vrsqrt.pop %v70
    %v72 = vmul.f32 %v70, %v71
    %vm73 = vcmp.eq.f32.partialorder %v70, inf
    %v74 = vsel %vm73, %v70, %v72
    %vm75 = vcmp.eq.f32.partialorder %v70, 0.0
    %v76 = vand.u32 %v70, 2147483648
    %v77 = vsel %vm75, %v76, %v74
    %v78 = vadd.f32 %v77, 1e-10
    %v79 = vrcp.pop %v78
    %v80 = vmul.f32 %v51, %v79
    %v81 = vsub.f32 %v66, %v80
    %v82 = vmul.f32 %v81, %v81
    %v83 = vld [vmem:[#allocation7] sm:$0xff]
    %v84 = vmul.f32 %v82, %v83
    %v85 = vsel %vm53, %v84, 0.0
    %86 = vadd.xlane.f32.xlu0 %v85
    %v87 = vpop.xlane.xlu0 %86
    %v88 = vrot.slane %v87, 4
    %v89 = vadd.f32 %v87, %v88
    %v90 = vrot.slane %v89, 2
    %v91 = vadd.f32 %v89, %v90
    %v92 = vrot.slane %v91, 1
    %v93 = vadd.f32 %v91, %v92
    %s94 = vtos %v93
    %v95 = vlaneseq
    %v96 = vshrl.u32 %v95, 7
    %v97 = vlaneseq
    %v98 = vand.u32 %v97, 127
    %vm99 = vcmp.eq.s32.totalorder %v96, 0
    %vm100 = vcmp.eq.s32.totalorder %v98, 0
    %vm101 = vmand %vm99, %vm100
    %v102 = vstv %s94
    %v103 = vsel %vm101, %v102, 0.0
    %104 = vst [vmem:[#allocation8] sm:$0xff] %v103
    // Predicated region
    $region26: #{tpu_custom_call.1} parent=1 // pred_check
      _
    $region27: #{tpu_custom_call.1} parent=1 // pred_check_branch
      %106 = sbr.rel (0) target = $region29
    $region28: #{tpu_custom_call.1} parent=1 // pred_region
      %s108 = ssub.s32 128, 128
      %109 = vsyncadd [#allocation4], %s108
      %s111 = sshll.u32 [#allocation8], 4
      %s112 = int_to_ptr.vmem [resolvable:$true] %s111
      %114 = dma.vmem_to_hbm [thread:$0]  %s112, 128, %s3, [#allocation4]
    $region29: #{tpu_custom_call.1} parent=1 // pred_fallthru
      _
    // Predicated region
    $region30: #{tpu_custom_call.1} parent=1 // pred_check
      _
    $region31: #{tpu_custom_call.1} parent=1 // pred_check_branch
      %116 = sbr.rel (0) target = $region33
    $region32: #{tpu_custom_call.1} parent=1 // pred_region
      %117 = dma.done [#allocation4], 128
    $region33: #{tpu_custom_call.1} parent=1 // pred_fallthru
      _
    %118 = vsyncpa [#allocation3], 1
    %119 = vsyncpa [#allocation6], 1
    %120 = vsyncpa [#allocation4], 1

</llo_original>
